<compile_context>
chip_gen: v7x
topology: tpu7x:2x2x1
jax: 0.10.0
libtpu: 0.0.40
codegen_flags: <defaults>
</compile_context>

<pallas_src>
import functools

import jax
import jax.numpy as jnp
from jax import lax
from jax.experimental import pallas as pl
from jax.experimental.pallas import tpu as pltpu


def _round_up(x, m):
    return -(-x // m) * m


def _fused_linear_ce_kernel(tgt_ref, xt_ref, w_ref, loss_ref,
                            m_sc, l_sc, t_sc, *,
                            ignore_index, v_total, mask_vocab):
    """Grid = (token_tiles, vocab_tiles); vocab (axis 1) is the reduction axis.

    tgt_ref : [1, TN]  int32  target ids for this token tile (lane-dense)
    xt_ref  : [D, TN]         hidden-state tile, pre-transposed
    w_ref   : [TV, D]         weight rows for this vocab tile
    loss_ref: [1, TN]  f32    per-token NLL (0 for ignored tokens)
    m_sc/l_sc/t_sc : [1, TN] f32 scratch (running max / sum-exp / target logit)
    """
    j = pl.program_id(1)
    tv = w_ref.shape[0]

    @pl.when(j == 0)
    def _():
        m_sc[...] = jnp.full_like(m_sc, -jnp.inf)
        l_sc[...] = jnp.zeros_like(l_sc)
        t_sc[...] = jnp.zeros_like(t_sc)

    # [TV, D] @ [D, TN] -> transposed logits [TV, TN]; contraction is
    # last-of-lhs x first-of-rhs so no operand transpose is materialized.
    logits = lax.dot_general(
        w_ref[...], xt_ref[...],
        dimension_numbers=(((1,), (0,)), ((), ())),
        preferred_element_type=jnp.float32)

    tgt = tgt_ref[...]                                          # [1, TN] int32
    # Global vocab id of every row in this tile: [TV, 1] column, broadcasts.
    row = lax.broadcasted_iota(jnp.int32, (tv, 1), 0) + j * tv

    if mask_vocab:  # static: only emitted when V % tv != 0 (ragged last tile)
        logits = jnp.where(row < v_total, logits, -jnp.inf)

    # Gather the target-class logit if it lives in this vocab tile.
    hit = row == tgt  # ignore_index (<0) and garbage rows never match
    t_sc[...] += jnp.sum(jnp.where(hit, logits, 0.0), axis=0, keepdims=True)

    # Online log-sum-exp over the vocab (sublane) axis.
    m_new = jnp.maximum(m_sc[...], logits.max(axis=0, keepdims=True))
    l_sc[...] = (l_sc[...] * jnp.exp(m_sc[...] - m_new)
                 + jnp.sum(jnp.exp(logits - m_new), axis=0, keepdims=True))
    m_sc[...] = m_new

    @pl.when(j == pl.num_programs(1) - 1)
    def _():
        lse = m_sc[...] + jnp.log(l_sc[...])
        per_tok = lse - t_sc[...]                 # -log softmax[target]
        valid = tgt != ignore_index
        loss_ref[...] = jnp.where(valid, per_tok, 0.0)


def _pick_tiles(N, V, D, itemsize):
    """Generation-aware (tn, tv, vmem_limit_bytes)."""
    try:
        kind = jax.devices()[0].device_kind.lower()
    except Exception:  # pragma: no cover - be robust if device query fails
        kind = ""
    if "v7" in kind:
        # v7x: ridge ~320 FLOP/byte per TC, but only 64 MiB physical VMEM.
        tn, tv, budget = 512, 512, 40 << 20
    elif "v5" in kind and ("lite" in kind or "5e" in kind):
        # v5e: ridge ~240 FLOP/byte; win comes from fewer, larger steps (tv).
        tn, tv, budget = 256, 1024, 64 << 20
    else:
        # v6e / v5p / unknown: weight-stream ridge ~650 FLOP/byte -> big tn.
        tn, tv, budget = 1024, 512, 96 << 20

    def est(tn_, tv_):
        # double-buffered xT + W tiles, plus ~16 B / logits element for the
        # f32 logits, exp and compare temporaries.
        return 2 * (tn_ + tv_) * D * itemsize + 16 * tn_ * tv_

    while est(tn, tv) > budget and tn > 128:   # halving keeps tn % 128 == 0
        tn //= 2
    while est(tn, tv) > budget and tv > 256:   # halving keeps tv % 8 == 0
        tv //= 2

    # Clamp to the problem size (tn stays a multiple of 128; tv stays a
    # multiple of 8 unless it equals the full vocab).
    tn = min(tn, _round_up(N, 128))
    if V <= tv:
        tv = V
    vmem_limit = int(max(est(tn, tv) + (8 << 20), 32 << 20))
    return tn, tv, vmem_limit


def liger_linear_cross_entropy_loss(weight, outputs, targets,
                                    ignore_index=-100, tn=None, tv=None):
    """Equivalent of LigerLinearCrossEntropyLoss.forward (reduction='mean').

    weight : [V, D]    output-projection weight (any float dtype, bf16 ideal)
    outputs: [B, S, D] hidden states before projection
    targets: [B, S]    int token ids (ignore_index entries are skipped)
    Returns scalar mean cross-entropy over non-ignored tokens.
    """
    B, S, D = outputs.shape
    V = weight.shape[0]
    N = B * S
    itemsize = jnp.dtype(outputs.dtype).itemsize

    tn_auto, tv_auto, vmem_limit = _pick_tiles(N, V, D, itemsize)
    tn = tn_auto if tn is None else tn
    tv = tv_auto if tv is None else tv

    x = outputs.reshape(N, D)                  # keep caller dtype (no f32 cast)
    t = targets.reshape(N).astype(jnp.int32)
    n_pad = _round_up(N, tn)
    if n_pad != N:
        x = jnp.pad(x, ((0, n_pad - N), (0, 0)))
        t = jnp.pad(t, (0, n_pad - N), constant_values=ignore_index)
    xt = x.T                                   # one-time transpose: K-major rhs

    # No weight pad copy: ragged last vocab tile is handled by in-kernel mask.
    grid_v = pl.cdiv(V, tv)
    mask_vocab = (V % tv) != 0

    kernel = functools.partial(
        _fused_linear_ce_kernel,
        ignore_index=ignore_index, v_total=V, mask_vocab=mask_vocab)

    cost = pl.CostEstimate(
        flops=2 * n_pad * V * D,
        transcendentals=n_pad * V,
        bytes_accessed=(n_pad * D * itemsize                       # xT once
                        + (n_pad // tn) * V * D * itemsize         # W re-stream
                        + n_pad * 8))                              # tgt + loss

    per_token = pl.pallas_call(
        kernel,
        out_shape=jax.ShapeDtypeStruct((1, n_pad), jnp.float32),
        grid_spec=pltpu.PrefetchScalarGridSpec(
            num_scalar_prefetch=0,
            grid=(n_pad // tn, grid_v),
            in_specs=[
                pl.BlockSpec((1, tn), lambda i, j: (0, i)),    # targets
                pl.BlockSpec((D, tn), lambda i, j: (0, i)),    # x^T tile
                pl.BlockSpec((tv, D), lambda i, j: (j, 0)),    # weight rows
            ],
            out_specs=pl.BlockSpec((1, tn), lambda i, j: (0, i)),
            scratch_shapes=[pltpu.VMEM((1, tn), jnp.float32)] * 3,
        ),
        compiler_params=pltpu.CompilerParams(
            dimension_semantics=("parallel", "arbitrary"),
            vmem_limit_bytes=vmem_limit),
        cost_estimate=cost,
    )(t.reshape(1, n_pad), xt, weight)

    per_token = per_token[0, :N]
    valid = (targets.reshape(-1) != ignore_index).astype(jnp.float32)
    # reduction='mean' over non-ignored tokens (matches torch F.cross_entropy;
    # an all-ignored batch yields NaN exactly like torch).
    return jnp.sum(per_token) / jnp.sum(valid)


if __name__ == "__main__":
    # Small, deterministic synthetic setup consistent with the module:
    # outputs [batch=2, seq=8, embed=32], weight [vocab=256, embed=32].
    B, S, D, V = 2, 8, 32, 256
    ignore_index = -100

    key = jax.random.PRNGKey(0)
    k_w, k_x, k_t = jax.random.split(key, 3)
    # bf16 operands feed the MXU directly (f32 accumulation inside the kernel).
    weight = (jax.random.normal(k_w, (V, D), dtype=jnp.float32) * 0.02
              ).astype(jnp.bfloat16)
    outputs = jax.random.normal(k_x, (B, S, D),
                                dtype=jnp.float32).astype(jnp.bfloat16)
    targets = jax.random.randint(k_t, (B, S), 0, V, dtype=jnp.int32)
    # Mark a couple of positions as padding (ignored).
    targets = targets.at[0, 0].set(ignore_index)
    targets = targets.at[1, 3].set(ignore_index)

    loss = liger_linear_cross_entropy_loss(weight, outputs, targets,
                                           ignore_index=ignore_index)
    loss = jax.block_until_ready(loss)

    # Pure-JAX reference check (bf16 matmul with f32 accumulation, like kernel).
    x = outputs.reshape(-1, D)
    t = targets.reshape(-1)
    logits = jnp.einsum('nd,vd->nv', x, weight,
                        preferred_element_type=jnp.float32)
    lse = jax.nn.logsumexp(logits, axis=-1)
    tgt_logit = jnp.take_along_axis(
        logits, jnp.clip(t, 0, V - 1)[:, None], axis=-1)[:, 0]
    valid = t != ignore_index
    ref = jnp.sum(jnp.where(valid, lse - tgt_logit, 0.0)) / jnp.sum(valid)
    assert jnp.allclose(loss, ref, rtol=2e-3, atol=2e-3), (loss, ref)

    print("KERNEL_OK")
</pallas_src>

<mosaic_0001>
module attributes {stable_mosaic.version = 11 : i64} {
  func.func @_fused_linear_ce_kernel(%arg0: i32, %arg1: i32, %arg2: memref<1x128xi32, #tpu.memory_space<vmem>>, %arg3: memref<32x128xbf16, #tpu.memory_space<vmem>>, %arg4: memref<256x32xbf16, #tpu.memory_space<vmem>>, %arg5: memref<1x128xf32, #tpu.memory_space<vmem>>, %arg6: memref<1x128xf32, #tpu.memory_space<vmem>>, %arg7: memref<1x128xf32, #tpu.memory_space<vmem>>, %arg8: memref<1x128xf32, #tpu.memory_space<vmem>>) attributes {dimension_semantics = [#tpu.dimension_semantics<parallel>, #tpu.dimension_semantics<arbitrary>], iteration_bounds = array<i64: 1, 1>, scalar_prefetch = 0 : i64, scratch_operands = 3 : i64, tpu.core_type = #tpu.core_type<tc>, window_params = [{transform_indices = @transform_0, window_bounds = array<i64: 1, 128>}, {transform_indices = @transform_1, window_bounds = array<i64: 32, 128>}, {transform_indices = @transform_2, window_bounds = array<i64: 256, 32>}, {transform_indices = @transform_3, window_bounds = array<i64: 1, 128>}]} {
    %c0_i32 = arith.constant 0 : i32
    %0 = arith.cmpi eq, %arg1, %c0_i32 : i32
    %1 = arith.extui %0 : i1 to i32
    %c0_i32_0 = arith.constant 0 : i32
    %2 = arith.cmpi ne, %1, %c0_i32_0 : i32
    scf.if %2 {
      %cst_26 = arith.constant 0xFF800000 : f32
      %41 = vector.broadcast %cst_26 : f32 to vector<1x128xf32>
      %c0_27 = arith.constant 0 : index
      %c0_28 = arith.constant 0 : index
      %42 = vector.load %arg6[%c0_27, %c0_28] : memref<1x128xf32, #tpu.memory_space<vmem>>, vector<1x128xf32>
      tpu.vector_store %arg6[%c0_27, %c0_28], %41 {strides = array<i32>} : memref<1x128xf32, #tpu.memory_space<vmem>>, vector<1x128xf32>,
      %cst_29 = arith.constant 0.000000e+00 : f32
      %43 = vector.broadcast %cst_29 : f32 to vector<1x128xf32>
      %c0_30 = arith.constant 0 : index
      %c0_31 = arith.constant 0 : index
      %44 = vector.load %arg7[%c0_30, %c0_31] : memref<1x128xf32, #tpu.memory_space<vmem>>, vector<1x128xf32>
      tpu.vector_store %arg7[%c0_30, %c0_31], %43 {strides = array<i32>} : memref<1x128xf32, #tpu.memory_space<vmem>>, vector<1x128xf32>,
      %cst_32 = arith.constant 0.000000e+00 : f32
      %45 = vector.broadcast %cst_32 : f32 to vector<1x128xf32>
      %c0_33 = arith.constant 0 : index
      %c0_34 = arith.constant 0 : index
      %46 = vector.load %arg8[%c0_33, %c0_34] : memref<1x128xf32, #tpu.memory_space<vmem>>, vector<1x128xf32>
      tpu.vector_store %arg8[%c0_33, %c0_34], %45 {strides = array<i32>} : memref<1x128xf32, #tpu.memory_space<vmem>>, vector<1x128xf32>,
    } else {
    }
    %c0 = arith.constant 0 : index
    %c0_1 = arith.constant 0 : index
    %3 = vector.load %arg4[%c0, %c0_1] : memref<256x32xbf16, #tpu.memory_space<vmem>>, vector<256x32xbf16>
    %c0_2 = arith.constant 0 : index
    %c0_3 = arith.constant 0 : index
    %4 = vector.load %arg3[%c0_2, %c0_3] : memref<32x128xbf16, #tpu.memory_space<vmem>>, vector<32x128xbf16>
    %cst = arith.constant dense<0.000000e+00> : vector<256x128xf32>
    %5 = tpu.matmul %3, %4, %cst {dimension_numbers = #tpu.dot_dimension_numbers<[1], [0], [0], [1], [0, 0, 1, 1], [], []>} : vector<256x32xbf16>, vector<32x128xbf16>, vector<256x128xf32> -> vector<256x128xf32>
    %c0_4 = arith.constant 0 : index
    %c0_5 = arith.constant 0 : index
    %6 = vector.load %arg2[%c0_4, %c0_5] : memref<1x128xi32, #tpu.memory_space<vmem>>, vector<1x128xi32>
    %7 = tpu.iota {dimensions = array<i32: 0>} : vector<256x1xi32>
    %c256_i32 = arith.constant 256 : i32
    %8 = arith.muli %arg1, %c256_i32 : i32
    %9 = vector.broadcast %8 : i32 to vector<256x1xi32>
    %10 = arith.addi %7, %9 : vector<256x1xi32>
    %11 = vector.broadcast %10 : vector<256x1xi32> to vector<256x128xi32>
    %12 = vector.broadcast %6 : vector<1x128xi32> to vector<256x128xi32>
    %13 = arith.cmpi eq, %11, %12 : vector<256x128xi32>
    %c0_6 = arith.constant 0 : index
    %c0_7 = arith.constant 0 : index
    %14 = vector.load %arg8[%c0_6, %c0_7] : memref<1x128xf32, #tpu.memory_space<vmem>>, vector<1x128xf32>
    %cst_8 = arith.constant 0.000000e+00 : f32
    %15 = vector.broadcast %cst_8 : f32 to vector<256x128xf32>
    %16 = arith.select %13, %5, %15 : vector<256x128xi1>, vector<256x128xf32>
    %cst_9 = arith.constant dense<0.000000e+00> : vector<128xf32>
    %17 = vector.multi_reduction <add>, %16, %cst_9 [0] : vector<256x128xf32> to vector<128xf32>
    %18 = vector.shape_cast %17 : vector<128xf32> to vector<1x128xf32>
    %19 = arith.addf %14, %18 : vector<1x128xf32>
    %c0_10 = arith.constant 0 : index
    %c0_11 = arith.constant 0 : index
    %20 = vector.load %arg8[%c0_10, %c0_11] : memref<1x128xf32, #tpu.memory_space<vmem>>, vector<1x128xf32>
    tpu.vector_store %arg8[%c0_10, %c0_11], %19 {strides = array<i32>} : memref<1x128xf32, #tpu.memory_space<vmem>>, vector<1x128xf32>,
    %c0_12 = arith.constant 0 : index
    %c0_13 = arith.constant 0 : index
    %21 = vector.load %arg6[%c0_12, %c0_13] : memref<1x128xf32, #tpu.memory_space<vmem>>, vector<1x128xf32>
    %cst_14 = arith.constant dense<0xFF800000> : vector<128xf32>
    %22 = vector.multi_reduction <maximumf>, %5, %cst_14 [0] : vector<256x128xf32> to vector<128xf32>
    %23 = vector.shape_cast %22 : vector<128xf32> to vector<1x128xf32>
    %24 = arith.maximumf %21, %23 : vector<1x128xf32>
    %c0_15 = arith.constant 0 : index
    %c0_16 = arith.constant 0 : index
    %25 = vector.load %arg7[%c0_15, %c0_16] : memref<1x128xf32, #tpu.memory_space<vmem>>, vector<1x128xf32>
    %c0_17 = arith.constant 0 : index
    %c0_18 = arith.constant 0 : index
    %26 = vector.load %arg6[%c0_17, %c0_18] : memref<1x128xf32, #tpu.memory_space<vmem>>, vector<1x128xf32>
    %27 = arith.subf %26, %24 : vector<1x128xf32>
    %28 = math.exp %27 : vector<1x128xf32>
    %29 = arith.mulf %25, %28 : vector<1x128xf32>
    %30 = vector.broadcast %24 : vector<1x128xf32> to vector<256x128xf32>
    %31 = arith.subf %5, %30 : vector<256x128xf32>
    %32 = math.exp %31 : vector<256x128xf32>
    %cst_19 = arith.constant dense<0.000000e+00> : vector<128xf32>
    %33 = vector.multi_reduction <add>, %32, %cst_19 [0] : vector<256x128xf32> to vector<128xf32>
    %34 = vector.shape_cast %33 : vector<128xf32> to vector<1x128xf32>
    %35 = arith.addf %29, %34 : vector<1x128xf32>
    %c0_20 = arith.constant 0 : index
    %c0_21 = arith.constant 0 : index
    %36 = vector.load %arg7[%c0_20, %c0_21] : memref<1x128xf32, #tpu.memory_space<vmem>>, vector<1x128xf32>
    tpu.vector_store %arg7[%c0_20, %c0_21], %35 {strides = array<i32>} : memref<1x128xf32, #tpu.memory_space<vmem>>, vector<1x128xf32>,
    %c0_22 = arith.constant 0 : index
    %c0_23 = arith.constant 0 : index
    %37 = vector.load %arg6[%c0_22, %c0_23] : memref<1x128xf32, #tpu.memory_space<vmem>>, vector<1x128xf32>
    tpu.vector_store %arg6[%c0_22, %c0_23], %24 {strides = array<i32>} : memref<1x128xf32, #tpu.memory_space<vmem>>, vector<1x128xf32>,
    %c0_i32_24 = arith.constant 0 : i32
    %38 = arith.cmpi eq, %arg1, %c0_i32_24 : i32
    %39 = arith.extui %38 : i1 to i32
    %c0_i32_25 = arith.constant 0 : i32
    %40 = arith.cmpi ne, %39, %c0_i32_25 : i32
    scf.if %40 {
      %c0_26 = arith.constant 0 : index
      %c0_27 = arith.constant 0 : index
      %41 = vector.load %arg6[%c0_26, %c0_27] : memref<1x128xf32, #tpu.memory_space<vmem>>, vector<1x128xf32>
      %c0_28 = arith.constant 0 : index
      %c0_29 = arith.constant 0 : index
      %42 = vector.load %arg7[%c0_28, %c0_29] : memref<1x128xf32, #tpu.memory_space<vmem>>, vector<1x128xf32>
      %43 = math.log %42 : vector<1x128xf32>
      %44 = arith.addf %41, %43 : vector<1x128xf32>
      %c0_30 = arith.constant 0 : index
      %c0_31 = arith.constant 0 : index
      %45 = vector.load %arg8[%c0_30, %c0_31] : memref<1x128xf32, #tpu.memory_space<vmem>>, vector<1x128xf32>
      %46 = arith.subf %44, %45 : vector<1x128xf32>
      %c-100_i32 = arith.constant -100 : i32
      %47 = vector.broadcast %c-100_i32 : i32 to vector<1x128xi32>
      %48 = arith.cmpi ne, %6, %47 : vector<1x128xi32>
      %cst_32 = arith.constant 0.000000e+00 : f32
      %49 = vector.broadcast %cst_32 : f32 to vector<1x128xf32>
      %50 = arith.select %48, %46, %49 : vector<1x128xi1>, vector<1x128xf32>
      %c0_33 = arith.constant 0 : index
      %c0_34 = arith.constant 0 : index
      %51 = vector.load %arg5[%c0_33, %c0_34] : memref<1x128xf32, #tpu.memory_space<vmem>>, vector<1x128xf32>
      tpu.vector_store %arg5[%c0_33, %c0_34], %50 {strides = array<i32>} : memref<1x128xf32, #tpu.memory_space<vmem>>, vector<1x128xf32>,
    } else {
    }
    return
  }
  func.func @transform_0(%arg0: i32, %arg1: i32) -> (i32, i32) {
    %c0_i32 = arith.constant 0 : i32
    %c0_i32_0 = arith.constant 0 : i32
    return %c0_i32, %arg0 : i32, i32
  }
  func.func @transform_1(%arg0: i32, %arg1: i32) -> (i32, i32) {
    %c0_i32 = arith.constant 0 : i32
    %c0_i32_0 = arith.constant 0 : i32
    return %c0_i32, %arg0 : i32, i32
  }
  func.func @transform_2(%arg0: i32, %arg1: i32) -> (i32, i32) {
    %c0_i32 = arith.constant 0 : i32
    %c0_i32_0 = arith.constant 0 : i32
    return %arg1, %c0_i32 : i32, i32
  }
  func.func @transform_3(%arg0: i32, %arg1: i32) -> (i32, i32) {
    %c0_i32 = arith.constant 0 : i32
    %c0_i32_0 = arith.constant 0 : i32
    return %c0_i32, %arg0 : i32, i32
  }
}

</mosaic_0001>

<llo_original>
// kernel: tpu_custom_call.1
$region0: #{tpu_custom_call.1}
  #allocation0 [shape = 'u32[]', space=smem, size = 0x4, offset = 0x4, fixed_abs, tag = 'smem constant byte address 0x4 - core index']
  #allocation1 [shape = 'u32[144,128]{1,0:T(1,128)}', space=vmem, size = 0x12000, scoped, tag = 'internal scratch']
  #allocation2 [shape = 'f32[1,128]{1,0:T(1,128)}', space=vmem, size = 0x200, scoped, tag = 'scratch operand']
  #allocation3 [shape = 'f32[1,128]{1,0:T(1,128)}', space=vmem, size = 0x200, scoped, tag = 'scratch operand']
  #allocation4 [shape = 'f32[1,128]{1,0:T(1,128)}', space=vmem, size = 0x200, scoped, tag = 'scratch operand']
  %s0 = inlined_call_operand.vmem [shape: s32[1,128], index: 0, kind: input, shape index: {}]
  %s1 = inlined_call_operand.vmem [shape: bf16[32,128], index: 1, kind: input, shape index: {}]
  %s2 = inlined_call_operand.vmem [shape: bf16[256,32], index: 2, kind: input, shape index: {}]
  %s3 = inlined_call_operand.hbm [shape: f32[1,128], index: 3, kind: output, shape index: {}]
  %s4 = sld [smem:[#allocation0]]
  $region30: #{tpu_custom_call.1} parent=0
    _
  %s6 = ssub.s32 1, %s4
  %s7 = scalar_select 0, %s6, %s4
  $region1: #{tpu_custom_call.1} parent=0
    #allocation5 [shape = 'u8[512]{0}', space=vmem, size = 0x400, scoped, tag = 'output window, operand 0, single buffered']
    #allocation6 [shape = 's32[1]{0}', space=sflag, size = 0x4, scoped, tag = 'scoped memory for tpu_custom_call.1']
    %8 = vsyncpa [#allocation6], 0
    // Predicated region
    $region2: #{tpu_custom_call.1} parent=1 // pred_check
      _
    $region3: #{tpu_custom_call.1} parent=1 // pred_check_branch
      %10 = sbr.rel (0) target = $region5
    $region4: #{tpu_custom_call.1} parent=1 // pred_region
      _
    $region5: #{tpu_custom_call.1} parent=1 // pred_fallthru
      _
    // Predicated region
    $region6: #{tpu_custom_call.1} parent=1 // pred_check
      _
    $region7: #{tpu_custom_call.1} parent=1 // pred_check_branch
      %12 = sbr.rel (0) target = $region9
    $region8: #{tpu_custom_call.1} parent=1 // pred_region
      _
    $region9: #{tpu_custom_call.1} parent=1 // pred_fallthru
      _
    // Predicated region
    $region10: #{tpu_custom_call.1} parent=1 // pred_check
      _
    $region11: #{tpu_custom_call.1} parent=1 // pred_check_branch
      %14 = sbr.rel (0) target = $region13
    $region12: #{tpu_custom_call.1} parent=1 // pred_region
      _
    $region13: #{tpu_custom_call.1} parent=1 // pred_fallthru
      _
    %p16 = scmp.eq.s32.totalorder 0, 0
    // Predicated region
    $region14: #{tpu_custom_call.1} parent=1 // pred_check
      %p17 = pneg %p16
    $region15: #{tpu_custom_call.1} parent=1 // pred_check_branch
      %19 = sbr.rel (%p17) target = $region17
    $region16: #{tpu_custom_call.1} parent=1 // pred_region
      %20 = vst [vmem:[#allocation2] sm:$0x1] -inf
      %21 = vst [vmem:[#allocation3] sm:$0x1] 0.0
      %22 = vst [vmem:[#allocation4] sm:$0x1] 0.0
    $region17: #{tpu_custom_call.1} parent=1 // pred_fallthru
      _
    %v23 = vld [vmem:[%s2] sm:$0xf]
    %v24 = vld [vmem:[%s2 + $0x4] sm:$0xf]
    %v25 = vld [vmem:[%s2 + $0x8] sm:$0xf]
    %v26 = vld [vmem:[%s2 + $0xc] sm:$0xf]
    %v27 = vld [vmem:[%s2 + $0x10] sm:$0xf]
    %v28 = vld [vmem:[%s2 + $0x14] sm:$0xf]
    %v29 = vld [vmem:[%s2 + $0x18] sm:$0xf]
    %v30 = vld [vmem:[%s2 + $0x1c] sm:$0xf]
    %v31 = vld [vmem:[%s2 + $0x20] sm:$0xf]
    %v32 = vld [vmem:[%s2 + $0x24] sm:$0xf]
    %v33 = vld [vmem:[%s2 + $0x28] sm:$0xf]
    %v34 = vld [vmem:[%s2 + $0x2c] sm:$0xf]
    %v35 = vld [vmem:[%s2 + $0x30] sm:$0xf]
    %v36 = vld [vmem:[%s2 + $0x34] sm:$0xf]
    %v37 = vld [vmem:[%s2 + $0x38] sm:$0xf]
    %v38 = vld [vmem:[%s2 + $0x3c] sm:$0xf]
    %v39 = vld [vmem:[%s2 + $0x40] sm:$0xf]
    %v40 = vld [vmem:[%s2 + $0x44] sm:$0xf]
    %v41 = vld [vmem:[%s2 + $0x48] sm:$0xf]
    %v42 = vld [vmem:[%s2 + $0x4c] sm:$0xf]
    %v43 = vld [vmem:[%s2 + $0x50] sm:$0xf]
    %v44 = vld [vmem:[%s2 + $0x54] sm:$0xf]
    %v45 = vld [vmem:[%s2 + $0x58] sm:$0xf]
    %v46 = vld [vmem:[%s2 + $0x5c] sm:$0xf]
    %v47 = vld [vmem:[%s2 + $0x60] sm:$0xf]
    %v48 = vld [vmem:[%s2 + $0x64] sm:$0xf]
    %v49 = vld [vmem:[%s2 + $0x68] sm:$0xf]
    %v50 = vld [vmem:[%s2 + $0x6c] sm:$0xf]
    %v51 = vld [vmem:[%s2 + $0x70] sm:$0xf]
    %v52 = vld [vmem:[%s2 + $0x74] sm:$0xf]
    %v53 = vld [vmem:[%s2 + $0x78] sm:$0xf]
    %v54 = vld [vmem:[%s2 + $0x7c] sm:$0xf]
    %v55 = vld [vmem:[%s1] sm:$0xf]
    %v56 = vld [vmem:[%s1 + $0x4] sm:$0xf]
    %v57 = vld [vmem:[%s1 + $0x8] sm:$0xf]
    %v58 = vld [vmem:[%s1 + $0xc] sm:$0xf]
    %v91 = vunpack.c.l.b16 %v23
    %v92 = vunpack.c.l.b16 %v24
    %v93 = vunpack.c.l.b16 %v25
    %v94 = vunpack.c.l.b16 %v26
    %v95 = vunpack.c.l.b16 %v27
    %v96 = vunpack.c.l.b16 %v28
    %v97 = vunpack.c.l.b16 %v29
    %v98 = vunpack.c.l.b16 %v30
    %v99 = vunpack.c.l.b16 %v31
    %v100 = vunpack.c.l.b16 %v32
    %v101 = vunpack.c.l.b16 %v33
    %v102 = vunpack.c.l.b16 %v34
    %v103 = vunpack.c.l.b16 %v35
    %v104 = vunpack.c.l.b16 %v36
    %v105 = vunpack.c.l.b16 %v37
    %v106 = vunpack.c.l.b16 %v38
    %v107 = vunpack.c.l.b16 %v39
    %v108 = vunpack.c.l.b16 %v40
    %v109 = vunpack.c.l.b16 %v41
    %v110 = vunpack.c.l.b16 %v42
    %v111 = vunpack.c.l.b16 %v43
    %v112 = vunpack.c.l.b16 %v44
    %v113 = vunpack.c.l.b16 %v45
    %v114 = vunpack.c.l.b16 %v46
    %v115 = vunpack.c.l.b16 %v47
    %v116 = vunpack.c.l.b16 %v48
    %v117 = vunpack.c.l.b16 %v49
    %v118 = vunpack.c.l.b16 %v50
    %v119 = vunpack.c.l.b16 %v51
    %v120 = vunpack.c.l.b16 %v52
    %v121 = vunpack.c.l.b16 %v53
    %v122 = vunpack.c.l.b16 %v54
    %v123 = vpack.c.b16 %v92, %v91
    %v124 = vpack.c.b16 %v94, %v93
    %v125 = vpack.c.b16 %v96, %v95
    %v126 = vpack.c.b16 %v98, %v97
    %v127 = vpack.c.b16 %v100, %v99
    %v128 = vpack.c.b16 %v102, %v101
    %v129 = vpack.c.b16 %v104, %v103
    %v130 = vpack.c.b16 %v106, %v105
    %v131 = vpack.c.b16 %v108, %v107
    %v132 = vpack.c.b16 %v110, %v109
    %v133 = vpack.c.b16 %v112, %v111
    %v134 = vpack.c.b16 %v114, %v113
    %v135 = vpack.c.b16 %v116, %v115
    %v136 = vpack.c.b16 %v118, %v117
    %v137 = vpack.c.b16 %v120, %v119
    %v138 = vpack.c.b16 %v122, %v121
    %v143 = vunpack.c.l.b16 %v55
    %v144 = vunpack.c.l.b16 %v56
    %v145 = vunpack.c.l.b16 %v57
    %v146 = vunpack.c.l.b16 %v58
    %v147 = vpack.c.b16 %v144, %v143
    %v148 = vpack.c.b16 %v146, %v145
    %vm151 = vcmask 261120
    %v153 = vsel %vm151, %v123, 0
    %v156 = vsel %vm151, %v124, 0
    %v159 = vsel %vm151, %v125, 0
    %v162 = vsel %vm151, %v126, 0
    %v165 = vsel %vm151, %v127, 0
    %v168 = vsel %vm151, %v128, 0
    %v171 = vsel %vm151, %v129, 0
    %v174 = vsel %vm151, %v130, 0
    %v177 = vsel %vm151, %v131, 0
    %v180 = vsel %vm151, %v132, 0
    %v183 = vsel %vm151, %v133, 0
    %v186 = vsel %vm151, %v134, 0
    %v189 = vsel %vm151, %v135, 0
    %v192 = vsel %vm151, %v136, 0
    %v195 = vsel %vm151, %v137, 0
    %v198 = vsel %vm151, %v138, 0
    %200 = vmatprep.subr.bf16.mxu0 0
    %201 = vmatpush1.bf16.msra.mxu0 %v147
    %202 = vmatprep.subr.bf16.mxu0 0
    %203 = vmatpush1.bf16.msra.mxu0 %v148
    %204 = vmatprep.subr.bf16.mxu0 0
    %205 = vmatpush1.bf16.msra.mxu0 0
    %206 = vmatprep.subr.bf16.mxu0 0
    %207 = vmatpush1.bf16.msra.mxu0 0
    %208 = vmatprep.subr.bf16.mxu0 0
    %209 = vmatpush1.bf16.msra.mxu0 0
    %210 = vmatprep.subr.bf16.mxu0 0
    %211 = vmatpush1.bf16.msra.mxu0 0
    %212 = vmatprep.subr.bf16.mxu0 0
    %213 = vmatpush1.bf16.msra.mxu0 0
    %214 = vmatprep.subr.bf16.mxu0 0
    %215 = vmatpush1.bf16.msra.mxu0 0
    %216 = vmatprep.subr.bf16.mxu0 0
    %217 = vmatpush1.bf16.msra.mxu0 0
    %218 = vmatprep.subr.bf16.mxu0 0
    %219 = vmatpush1.bf16.msra.mxu0 0
    %220 = vmatprep.subr.bf16.mxu0 0
    %221 = vmatpush1.bf16.msra.mxu0 0
    %222 = vmatprep.subr.bf16.mxu0 0
    %223 = vmatpush1.bf16.msra.mxu0 0
    %224 = vmatprep.subr.bf16.mxu0 0
    %225 = vmatpush1.bf16.msra.mxu0 0
    %226 = vmatprep.subr.bf16.mxu0 0
    %227 = vmatpush1.bf16.msra.mxu0 0
    %228 = vmatprep.subr.bf16.mxu0 0
    %229 = vmatpush1.bf16.msra.mxu0 0
    %230 = vmatprep.subr.bf16.mxu0 0
    %231 = vmatpush1.bf16.msra.mxu0 0
    %232 = vmatprep.mubr.bf16.mxu0 0
    %233 = vmatmul.mubr.bf16.gmra.mrb[0].mxu0 %v153
    %v234 = vpop.f32.mrb[0].mxu0
    %v235 = vadd.f32 0.0, %v234
    %v236 = vpop.f32.mrb[0].mxu0
    %v237 = vpop.f32.mrb[0].mxu0
    %v238 = vadd.f32 0.0, %v237
    %v239 = vpop.f32.mrb[0].mxu0
    %240 = vmatprep.mubr.bf16.mxu0 0
    %241 = vmatmul.mubr.bf16.gmra.mrb[0].mxu0 %v156
    %v242 = vpop.f32.mrb[0].mxu0
    %v243 = vadd.f32 0.0, %v242
    %v244 = vpop.f32.mrb[0].mxu0
    %v245 = vpop.f32.mrb[0].mxu0
    %v246 = vadd.f32 0.0, %v245
    %v247 = vpop.f32.mrb[0].mxu0
    %248 = vmatprep.mubr.bf16.mxu0 0
    %249 = vmatmul.mubr.bf16.gmra.mrb[0].mxu0 %v159
    %v250 = vpop.f32.mrb[0].mxu0
    %v251 = vadd.f32 0.0, %v250
    %v252 = vpop.f32.mrb[0].mxu0
    %v253 = vpop.f32.mrb[0].mxu0
    %v254 = vadd.f32 0.0, %v253
    %v255 = vpop.f32.mrb[0].mxu0
    %256 = vmatprep.mubr.bf16.mxu0 0
    %257 = vmatmul.mubr.bf16.gmra.mrb[0].mxu0 %v162
    %v258 = vpop.f32.mrb[0].mxu0
    %v259 = vadd.f32 0.0, %v258
    %v260 = vpop.f32.mrb[0].mxu0
    %v261 = vpop.f32.mrb[0].mxu0
    %v262 = vadd.f32 0.0, %v261
    %v263 = vpop.f32.mrb[0].mxu0
    %264 = vmatprep.mubr.bf16.mxu0 0
    %265 = vmatmul.mubr.bf16.gmra.mrb[0].mxu0 %v165
    %v266 = vpop.f32.mrb[0].mxu0
    %v267 = vadd.f32 0.0, %v266
    %v268 = vpop.f32.mrb[0].mxu0
    %v269 = vpop.f32.mrb[0].mxu0
    %v270 = vadd.f32 0.0, %v269
    %v271 = vpop.f32.mrb[0].mxu0
    %272 = vmatprep.mubr.bf16.mxu0 0
    %273 = vmatmul.mubr.bf16.gmra.mrb[0].mxu0 %v168
    %v274 = vpop.f32.mrb[0].mxu0
    %v275 = vadd.f32 0.0, %v274
    %v276 = vpop.f32.mrb[0].mxu0
    %v277 = vpop.f32.mrb[0].mxu0
    %v278 = vadd.f32 0.0, %v277
    %v279 = vpop.f32.mrb[0].mxu0
    %280 = vmatprep.mubr.bf16.mxu0 0
    %281 = vmatmul.mubr.bf16.gmra.mrb[0].mxu0 %v171
    %v282 = vpop.f32.mrb[0].mxu0
    %v283 = vadd.f32 0.0, %v282
    %v284 = vpop.f32.mrb[0].mxu0
    %v285 = vpop.f32.mrb[0].mxu0
    %v286 = vadd.f32 0.0, %v285
    %v287 = vpop.f32.mrb[0].mxu0
    %288 = vmatprep.mubr.bf16.mxu0 0
    %289 = vmatmul.mubr.bf16.gmra.mrb[0].mxu0 %v174
    %v290 = vpop.f32.mrb[0].mxu0
    %v291 = vadd.f32 0.0, %v290
    %v292 = vpop.f32.mrb[0].mxu0
    %v293 = vpop.f32.mrb[0].mxu0
    %v294 = vadd.f32 0.0, %v293
    %v295 = vpop.f32.mrb[0].mxu0
    %296 = vmatprep.mubr.bf16.mxu0 0
    %297 = vmatmul.mubr.bf16.gmra.mrb[0].mxu0 %v177
    %v298 = vpop.f32.mrb[0].mxu0
    %v299 = vadd.f32 0.0, %v298
    %v300 = vpop.f32.mrb[0].mxu0
    %v301 = vpop.f32.mrb[0].mxu0
    %v302 = vadd.f32 0.0, %v301
    %v303 = vpop.f32.mrb[0].mxu0
    %304 = vmatprep.mubr.bf16.mxu0 0
    %305 = vmatmul.mubr.bf16.gmra.mrb[0].mxu0 %v180
    %v306 = vpop.f32.mrb[0].mxu0
    %v307 = vadd.f32 0.0, %v306
    %v308 = vpop.f32.mrb[0].mxu0
    %v309 = vpop.f32.mrb[0].mxu0
    %v310 = vadd.f32 0.0, %v309
    %v311 = vpop.f32.mrb[0].mxu0
    %312 = vmatprep.mubr.bf16.mxu0 0
    %313 = vmatmul.mubr.bf16.gmra.mrb[0].mxu0 %v183
    %v314 = vpop.f32.mrb[0].mxu0
    %v315 = vadd.f32 0.0, %v314
    %v316 = vpop.f32.mrb[0].mxu0
    %v317 = vpop.f32.mrb[0].mxu0
    %v318 = vadd.f32 0.0, %v317
    %v319 = vpop.f32.mrb[0].mxu0
    %320 = vmatprep.mubr.bf16.mxu0 0
    %321 = vmatmul.mubr.bf16.gmra.mrb[0].mxu0 %v186
    %v322 = vpop.f32.mrb[0].mxu0
    %v323 = vadd.f32 0.0, %v322
    %v324 = vpop.f32.mrb[0].mxu0
    %v325 = vpop.f32.mrb[0].mxu0
    %v326 = vadd.f32 0.0, %v325
    %v327 = vpop.f32.mrb[0].mxu0
    %328 = vmatprep.mubr.bf16.mxu0 0
    %329 = vmatmul.mubr.bf16.gmra.mrb[0].mxu0 %v189
    %v330 = vpop.f32.mrb[0].mxu0
    %v331 = vadd.f32 0.0, %v330
    %v332 = vpop.f32.mrb[0].mxu0
    %v333 = vpop.f32.mrb[0].mxu0
    %v334 = vadd.f32 0.0, %v333
    %v335 = vpop.f32.mrb[0].mxu0
    %336 = vmatprep.mubr.bf16.mxu0 0
    %337 = vmatmul.mubr.bf16.gmra.mrb[0].mxu0 %v192
    %v338 = vpop.f32.mrb[0].mxu0
    %v339 = vadd.f32 0.0, %v338
    %v340 = vpop.f32.mrb[0].mxu0
    %v341 = vpop.f32.mrb[0].mxu0
    %v342 = vadd.f32 0.0, %v341
    %v343 = vpop.f32.mrb[0].mxu0
    %344 = vmatprep.mubr.bf16.mxu0 0
    %345 = vmatmul.mubr.bf16.gmra.mrb[0].mxu0 %v195
    %v346 = vpop.f32.mrb[0].mxu0
    %v347 = vadd.f32 0.0, %v346
    %v348 = vpop.f32.mrb[0].mxu0
    %v349 = vpop.f32.mrb[0].mxu0
    %v350 = vadd.f32 0.0, %v349
    %v351 = vpop.f32.mrb[0].mxu0
    %352 = vmatprep.mubr.bf16.mxu0 0
    %353 = vmatmul.mubr.bf16.gmra.mrb[0].mxu0 %v198
    %v354 = vpop.f32.mrb[0].mxu0
    %v355 = vadd.f32 0.0, %v354
    %v356 = vpop.f32.mrb[0].mxu0
    %v357 = vpop.f32.mrb[0].mxu0
    %v358 = vadd.f32 0.0, %v357
    %v359 = vpop.f32.mrb[0].mxu0
    %360 = vdwg.mxu0
    %v361 = vld [vmem:[%s0] sm:$0x1]
    %v362 = vlaneseq
    %v363 = vshrl.u32 %v362, 7
    %v364 = vadd.s32 %v363, 8
    %v365 = vadd.s32 %v363, 16
    %v366 = vadd.s32 %v363, 24
    %v367 = vadd.s32 %v363, 32
    %v368 = vadd.s32 %v363, 40
    %v369 = vadd.s32 %v363, 48
    %v370 = vadd.s32 %v363, 56
    %v371 = vadd.s32 %v363, 64
    %v372 = vadd.s32 %v363, 72
    %v373 = vadd.s32 %v363, 80
    %v374 = vadd.s32 %v363, 88
    %v375 = vadd.s32 %v363, 96
    %v376 = vadd.s32 %v363, 104
    %v377 = vadd.s32 %v363, 112
    %v378 = vadd.s32 %v363, 120
    %v379 = vadd.s32 %v363, 128
    %v380 = vadd.s32 %v363, 136
    %v381 = vadd.s32 %v363, 144
    %v382 = vadd.s32 %v363, 152
    %v383 = vadd.s32 %v363, 160
    %v384 = vadd.s32 %v363, 168
    %v385 = vadd.s32 %v363, 176
    %v386 = vadd.s32 %v363, 184
    %v387 = vadd.s32 %v363, 192
    %v388 = vadd.s32 %v363, 200
    %v389 = vadd.s32 %v363, 208
    %v390 = vadd.s32 %v363, 216
    %v391 = vadd.s32 %v363, 224
    %v392 = vadd.s32 %v363, 232
    %v393 = vadd.s32 %v363, 240
    %v394 = vadd.s32 %v363, 248
    %s395 = smul.u32 0, 256
    %v396 = vstv %s395
    %v397 = vadd.s32 %v363, %v396
    %v398 = vadd.s32 %v364, %v396
    %v399 = vadd.s32 %v365, %v396
    %v400 = vadd.s32 %v366, %v396
    %v401 = vadd.s32 %v367, %v396
    %v402 = vadd.s32 %v368, %v396
    %v403 = vadd.s32 %v369, %v396
    %v404 = vadd.s32 %v370, %v396
    %v405 = vadd.s32 %v371, %v396
    %v406 = vadd.s32 %v372, %v396
    %v407 = vadd.s32 %v373, %v396
    %v408 = vadd.s32 %v374, %v396
    %v409 = vadd.s32 %v375, %v396
    %v410 = vadd.s32 %v376, %v396
    %v411 = vadd.s32 %v377, %v396
    %v412 = vadd.s32 %v378, %v396
    %v413 = vadd.s32 %v379, %v396
    %v414 = vadd.s32 %v380, %v396
    %v415 = vadd.s32 %v381, %v396
    %v416 = vadd.s32 %v382, %v396
    %v417 = vadd.s32 %v383, %v396
    %v418 = vadd.s32 %v384, %v396
    %v419 = vadd.s32 %v385, %v396
    %v420 = vadd.s32 %v386, %v396
    %v421 = vadd.s32 %v387, %v396
    %v422 = vadd.s32 %v388, %v396
    %v423 = vadd.s32 %v389, %v396
    %v424 = vadd.s32 %v390, %v396
    %v425 = vadd.s32 %v391, %v396
    %v426 = vadd.s32 %v392, %v396
    %v427 = vadd.s32 %v393, %v396
    %v428 = vadd.s32 %v394, %v396
    %v429 = vlaneseq
    %v430 = vshrl.u32 %v429, 7
    %v431 = vsub.s32 0, %v430
    %v432 = vrot.slane %v361, %v431
    %vm433 = vcmp.eq.s32.totalorder %v397, %v432
    %vm434 = vcmp.eq.s32.totalorder %v398, %v432
    %vm435 = vcmp.eq.s32.totalorder %v399, %v432
    %vm436 = vcmp.eq.s32.totalorder %v400, %v432
    %vm437 = vcmp.eq.s32.totalorder %v401, %v432
    %vm438 = vcmp.eq.s32.totalorder %v402, %v432
    %vm439 = vcmp.eq.s32.totalorder %v403, %v432
    %vm440 = vcmp.eq.s32.totalorder %v404, %v432
    %vm441 = vcmp.eq.s32.totalorder %v405, %v432
    %vm442 = vcmp.eq.s32.totalorder %v406, %v432
    %vm443 = vcmp.eq.s32.totalorder %v407, %v432
    %vm444 = vcmp.eq.s32.totalorder %v408, %v432
    %vm445 = vcmp.eq.s32.totalorder %v409, %v432
    %vm446 = vcmp.eq.s32.totalorder %v410, %v432
    %vm447 = vcmp.eq.s32.totalorder %v411, %v432
    %vm448 = vcmp.eq.s32.totalorder %v412, %v432
    %vm449 = vcmp.eq.s32.totalorder %v413, %v432
    %vm450 = vcmp.eq.s32.totalorder %v414, %v432
    %vm451 = vcmp.eq.s32.totalorder %v415, %v432
    %vm452 = vcmp.eq.s32.totalorder %v416, %v432
    %vm453 = vcmp.eq.s32.totalorder %v417, %v432
    %vm454 = vcmp.eq.s32.totalorder %v418, %v432
    %vm455 = vcmp.eq.s32.totalorder %v419, %v432
    %vm456 = vcmp.eq.s32.totalorder %v420, %v432
    %vm457 = vcmp.eq.s32.totalorder %v421, %v432
    %vm458 = vcmp.eq.s32.totalorder %v422, %v432
    %vm459 = vcmp.eq.s32.totalorder %v423, %v432
    %vm460 = vcmp.eq.s32.totalorder %v424, %v432
    %vm461 = vcmp.eq.s32.totalorder %v425, %v432
    %vm462 = vcmp.eq.s32.totalorder %v426, %v432
    %vm463 = vcmp.eq.s32.totalorder %v427, %v432
    %vm464 = vcmp.eq.s32.totalorder %v428, %v432
    %v465 = vld [vmem:[#allocation4] sm:$0x1]
    %v466 = vsel %vm433, %v235, 0.0
    %v467 = vsel %vm434, %v238, 0.0
    %v468 = vsel %vm435, %v243, 0.0
    %v469 = vsel %vm436, %v246, 0.0
    %v470 = vsel %vm437, %v251, 0.0
    %v471 = vsel %vm438, %v254, 0.0
    %v472 = vsel %vm439, %v259, 0.0
    %v473 = vsel %vm440, %v262, 0.0
    %v474 = vsel %vm441, %v267, 0.0
    %v475 = vsel %vm442, %v270, 0.0
    %v476 = vsel %vm443, %v275, 0.0
    %v477 = vsel %vm444, %v278, 0.0
    %v478 = vsel %vm445, %v283, 0.0
    %v479 = vsel %vm446, %v286, 0.0
    %v480 = vsel %vm447, %v291, 0.0
    %v481 = vsel %vm448, %v294, 0.0
    %v482 = vsel %vm449, %v299, 0.0
    %v483 = vsel %vm450, %v302, 0.0
    %v484 = vsel %vm451, %v307, 0.0
    %v485 = vsel %vm452, %v310, 0.0
    %v486 = vsel %vm453, %v315, 0.0
    %v487 = vsel %vm454, %v318, 0.0
    %v488 = vsel %vm455, %v323, 0.0
    %v489 = vsel %vm456, %v326, 0.0
    %v490 = vsel %vm457, %v331, 0.0
    %v491 = vsel %vm458, %v334, 0.0
    %v492 = vsel %vm459, %v339, 0.0
    %v493 = vsel %vm460, %v342, 0.0
    %v494 = vsel %vm461, %v347, 0.0
    %v495 = vsel %vm462, %v350, 0.0
    %v496 = vsel %vm463, %v355, 0.0
    %v497 = vsel %vm464, %v358, 0.0
    %v498 = vadd.f32 %v466, %v467
    %v499 = vadd.f32 %v498, %v468
    %v500 = vadd.f32 %v499, %v469
    %v501 = vadd.f32 %v500, %v470
    %v502 = vadd.f32 %v501, %v471
    %v503 = vadd.f32 %v502, %v472
    %v504 = vadd.f32 %v503, %v473
    %v505 = vadd.f32 %v504, %v474
    %v506 = vadd.f32 %v505, %v475
    %v507 = vadd.f32 %v506, %v476
    %v508 = vadd.f32 %v507, %v477
    %v509 = vadd.f32 %v508, %v478
    %v510 = vadd.f32 %v509, %v479
    %v511 = vadd.f32 %v510, %v480
    %v512 = vadd.f32 %v511, %v481
    %v513 = vadd.f32 %v512, %v482
    %v514 = vadd.f32 %v513, %v483
    %v515 = vadd.f32 %v514, %v484
    %v516 = vadd.f32 %v515, %v485
    %v517 = vadd.f32 %v516, %v486
    %v518 = vadd.f32 %v517, %v487
    %v519 = vadd.f32 %v518, %v488
    %v520 = vadd.f32 %v519, %v489
    %v521 = vadd.f32 %v520, %v490
    %v522 = vadd.f32 %v521, %v491
    %v523 = vadd.f32 %v522, %v492
    %v524 = vadd.f32 %v523, %v493
    %v525 = vadd.f32 %v524, %v494
    %v526 = vadd.f32 %v525, %v495
    %v527 = vadd.f32 %v526, %v496
    %v528 = vadd.f32 %v527, %v497
    %v529 = vrot.slane %v528, 4
    %v530 = vadd.f32 %v528, %v529
    %v531 = vrot.slane %v530, 2
    %v532 = vadd.f32 %v530, %v531
    %v533 = vrot.slane %v532, 1
    %v534 = vadd.f32 %v532, %v533
    %v535 = vadd.f32 %v465, %v534
    %536 = vst [vmem:[#allocation4] sm:$0x1] %v535
    %v537 = vld [vmem:[#allocation2] sm:$0x1]
    %v538 = vmax.f32 %v235, %v251
    %v539 = vmax.f32 %v238, %v254
    %v540 = vmax.f32 %v243, %v259
    %v541 = vmax.f32 %v246, %v262
    %v542 = vmax.f32 %v538, %v267
    %v543 = vmax.f32 %v539, %v270
    %v544 = vmax.f32 %v540, %v275
    %v545 = vmax.f32 %v541, %v278
    %v546 = vmax.f32 %v542, %v283
    %v547 = vmax.f32 %v543, %v286
    %v548 = vmax.f32 %v544, %v291
    %v549 = vmax.f32 %v545, %v294
    %v550 = vmax.f32 %v546, %v299
    %v551 = vmax.f32 %v547, %v302
    %v552 = vmax.f32 %v548, %v307
    %v553 = vmax.f32 %v549, %v310
    %v554 = vmax.f32 %v550, %v315
    %v555 = vmax.f32 %v551, %v318
    %v556 = vmax.f32 %v552, %v323
    %v557 = vmax.f32 %v553, %v326
    %v558 = vmax.f32 %v554, %v331
    %v559 = vmax.f32 %v555, %v334
    %v560 = vmax.f32 %v556, %v339
    %v561 = vmax.f32 %v557, %v342
    %v562 = vmax.f32 %v558, %v347
    %v563 = vmax.f32 %v559, %v350
    %v564 = vmax.f32 %v560, %v355
    %v565 = vmax.f32 %v561, %v358
    %v566 = vmax.f32 %v562, %v563
    %v567 = vmax.f32 %v564, %v565
    %v568 = vmax.f32 %v566, %v567
    %v569 = vrot.slane %v568, 4
    %v570 = vmax.f32 %v568, %v569
    %v571 = vrot.slane %v570, 2
    %v572 = vmax.f32 %v570, %v571
    %v573 = vrot.slane %v572, 1
    %v574 = vmax.f32 %v572, %v573
    %v575 = vmax.f32 %v537, %v574
    %v576 = vld [vmem:[#allocation3] sm:$0x1]
    %v577 = vsub.f32 %v537, %v575
    %v578 = vmul.f32 %v577, 1.442695
    %v579 = vpow.pop %v578
    %v580 = vmul.f32 %v576, %v579
    %v582 = vlaneseq
    %v583 = vshrl.u32 %v582, 7
    %v584 = vsub.s32 0, %v583
    %v585 = vrot.slane %v575, %v584
    %v587 = vsub.f32 %v235, %v585
    %v588 = vsub.f32 %v238, %v585
    %v589 = vsub.f32 %v243, %v585
    %v590 = vsub.f32 %v246, %v585
    %v591 = vsub.f32 %v251, %v585
    %v592 = vsub.f32 %v254, %v585
    %v593 = vsub.f32 %v259, %v585
    %v594 = vsub.f32 %v262, %v585
    %v595 = vsub.f32 %v267, %v585
    %v596 = vsub.f32 %v270, %v585
    %v597 = vsub.f32 %v275, %v585
    %v598 = vsub.f32 %v278, %v585
    %v599 = vsub.f32 %v283, %v585
    %v600 = vsub.f32 %v286, %v585
    %v601 = vsub.f32 %v291, %v585
    %v602 = vsub.f32 %v294, %v585
    %v603 = vsub.f32 %v299, %v585
    %v604 = vsub.f32 %v302, %v585
    %v605 = vsub.f32 %v307, %v585
    %v606 = vsub.f32 %v310, %v585
    %v607 = vsub.f32 %v315, %v585
    %v608 = vsub.f32 %v318, %v585
    %v609 = vsub.f32 %v323, %v585
    %v610 = vsub.f32 %v326, %v585
    %v611 = vsub.f32 %v331, %v585
    %v612 = vsub.f32 %v334, %v585
    %v613 = vsub.f32 %v339, %v585
    %v614 = vsub.f32 %v342, %v585
    %v615 = vsub.f32 %v347, %v585
    %v616 = vsub.f32 %v350, %v585
    %v617 = vsub.f32 %v355, %v585
    %v618 = vsub.f32 %v358, %v585
    %v619 = vmul.f32 %v587, 1.442695
    %v620 = vpow.pop %v619
    %v621 = vmul.f32 %v588, 1.442695
    %v622 = vpow.pop %v621
    %v623 = vmul.f32 %v589, 1.442695
    %v624 = vpow.pop %v623
    %v625 = vmul.f32 %v590, 1.442695
    %v626 = vpow.pop %v625
    %v627 = vmul.f32 %v591, 1.442695
    %v628 = vpow.pop %v627
    %v629 = vmul.f32 %v592, 1.442695
    %v630 = vpow.pop %v629
    %v631 = vmul.f32 %v593, 1.442695
    %v632 = vpow.pop %v631
    %v633 = vmul.f32 %v594, 1.442695
    %v634 = vpow.pop %v633
    %v635 = vmul.f32 %v595, 1.442695
    %v636 = vpow.pop %v635
    %v637 = vmul.f32 %v596, 1.442695
    %v638 = vpow.pop %v637
    %v639 = vmul.f32 %v597, 1.442695
    %v640 = vpow.pop %v639
    %v641 = vmul.f32 %v598, 1.442695
    %v642 = vpow.pop %v641
    %v643 = vmul.f32 %v599, 1.442695
    %v644 = vpow.pop %v643
    %v645 = vmul.f32 %v600, 1.442695
    %v646 = vpow.pop %v645
    %v647 = vmul.f32 %v601, 1.442695
    %v648 = vpow.pop %v647
    %v649 = vmul.f32 %v602, 1.442695
    %v650 = vpow.pop %v649
    %v651 = vmul.f32 %v603, 1.442695
    %v652 = vpow.pop %v651
    %v653 = vmul.f32 %v604, 1.442695
    %v654 = vpow.pop %v653
    %v655 = vmul.f32 %v605, 1.442695
    %v656 = vpow.pop %v655
    %v657 = vmul.f32 %v606, 1.442695
    %v658 = vpow.pop %v657
    %v659 = vmul.f32 %v607, 1.442695
    %v660 = vpow.pop %v659
    %v661 = vmul.f32 %v608, 1.442695
    %v662 = vpow.pop %v661
    %v663 = vmul.f32 %v609, 1.442695
    %v664 = vpow.pop %v663
    %v665 = vmul.f32 %v610, 1.442695
    %v666 = vpow.pop %v665
    %v667 = vmul.f32 %v611, 1.442695
    %v668 = vpow.pop %v667
    %v669 = vmul.f32 %v612, 1.442695
    %v670 = vpow.pop %v669
    %v671 = vmul.f32 %v613, 1.442695
    %v672 = vpow.pop %v671
    %v673 = vmul.f32 %v614, 1.442695
    %v674 = vpow.pop %v673
    %v675 = vmul.f32 %v615, 1.442695
    %v676 = vpow.pop %v675
    %v677 = vmul.f32 %v616, 1.442695
    %v678 = vpow.pop %v677
    %v679 = vmul.f32 %v617, 1.442695
    %v680 = vpow.pop %v679
    %v681 = vmul.f32 %v618, 1.442695
    %v682 = vpow.pop %v681
    %v683 = vadd.f32 %v620, %v622
    %v684 = vadd.f32 %v683, %v624
    %v685 = vadd.f32 %v684, %v626
    %v686 = vadd.f32 %v685, %v628
    %v687 = vadd.f32 %v686, %v630
    %v688 = vadd.f32 %v687, %v632
    %v689 = vadd.f32 %v688, %v634
    %v690 = vadd.f32 %v689, %v636
    %v691 = vadd.f32 %v690, %v638
    %v692 = vadd.f32 %v691, %v640
    %v693 = vadd.f32 %v692, %v642
    %v694 = vadd.f32 %v693, %v644
    %v695 = vadd.f32 %v694, %v646
    %v696 = vadd.f32 %v695, %v648
    %v697 = vadd.f32 %v696, %v650
    %v698 = vadd.f32 %v697, %v652
    %v699 = vadd.f32 %v698, %v654
    %v700 = vadd.f32 %v699, %v656
    %v701 = vadd.f32 %v700, %v658
    %v702 = vadd.f32 %v701, %v660
    %v703 = vadd.f32 %v702, %v662
    %v704 = vadd.f32 %v703, %v664
    %v705 = vadd.f32 %v704, %v666
    %v706 = vadd.f32 %v705, %v668
    %v707 = vadd.f32 %v706, %v670
    %v708 = vadd.f32 %v707, %v672
    %v709 = vadd.f32 %v708, %v674
    %v710 = vadd.f32 %v709, %v676
    %v711 = vadd.f32 %v710, %v678
    %v712 = vadd.f32 %v711, %v680
    %v713 = vadd.f32 %v712, %v682
    %v714 = vrot.slane %v713, 4
    %v715 = vadd.f32 %v713, %v714
    %v716 = vrot.slane %v715, 2
    %v717 = vadd.f32 %v715, %v716
    %v718 = vrot.slane %v717, 1
    %v719 = vadd.f32 %v717, %v718
    %v720 = vadd.f32 %v580, %v719
    %721 = vst [vmem:[#allocation3] sm:$0x1] %v720
    %722 = vst [vmem:[#allocation2] sm:$0x1] %v575
    // Predicated region
    $region18: #{tpu_custom_call.1} parent=1 // pred_check
      %p723 = pneg %p16
    $region19: #{tpu_custom_call.1} parent=1 // pred_check_branch
      %725 = sbr.rel (%p723) target = $region21
    $region20: #{tpu_custom_call.1} parent=1 // pred_region
      %v726 = vld [vmem:[#allocation2] sm:$0x1]
      %v727 = vld [vmem:[#allocation3] sm:$0x1]
      %v728 = vlog2.pop %v727
      %v729 = vmul.f32 %v728, 0.6931472
      %v730 = vadd.f32 %v726, %v729
      %v731 = vld [vmem:[#allocation4] sm:$0x1]
      %v732 = vsub.f32 %v730, %v731
      %vm733 = vcmp.ne.s32.totalorder %v361, 4294967196
      %v734 = vsel %vm733, %v732, 0.0
      %735 = vst [vmem:[#allocation5] sm:$0x1] %v734
    $region21: #{tpu_custom_call.1} parent=1 // pred_fallthru
      _
    // Predicated region
    $region22: #{tpu_custom_call.1} parent=1 // pred_check
      _
    $region23: #{tpu_custom_call.1} parent=1 // pred_check_branch
      %737 = sbr.rel (0) target = $region25
    $region24: #{tpu_custom_call.1} parent=1 // pred_region
      %s739 = ssub.s32 16, 16
      %740 = vsyncadd [#allocation6], %s739
      %s742 = sshll.u32 [#allocation5], 4
      %s743 = int_to_ptr.vmem [resolvable:$true] %s742
      %745 = dma.vmem_to_hbm [thread:$0]  %s743, 16, %s3, [#allocation6]
    $region25: #{tpu_custom_call.1} parent=1 // pred_fallthru
      _
    // Predicated region
    $region26: #{tpu_custom_call.1} parent=1 // pred_check
      _
    $region27: #{tpu_custom_call.1} parent=1 // pred_check_branch
      %747 = sbr.rel (0) target = $region29
    $region28: #{tpu_custom_call.1} parent=1 // pred_region
      %748 = dma.done [#allocation6], 16
    $region29: #{tpu_custom_call.1} parent=1 // pred_fallthru
      _
    %749 = vsyncpa [#allocation6], 1

</llo_original>
